<compile_context>
chip_gen: v6e
topology: v6e:2x2x1
jax: 0.10.0
libtpu: 0.0.40
codegen_flags: <defaults>
</compile_context>

<pallas_src>
import functools

import jax
import jax.numpy as jnp
from jax import lax
from jax.experimental import pallas as pl
from jax.experimental.pallas import tpu as pltpu


def rbm_kernel(v_ref, w_ref, hb_ref, vb_ref, rh_ref, rv_ref,
               v_out_ref, h_out_ref, *, k):
    W = w_ref[...]                                  # (n_hin, n_vis), bf16, resident
    n_hin, n_vis = W.shape
    tb = v_ref.shape[0]

    # Hoist bias broadcasts out of the (unrolled) Gibbs loop.
    hb_b = jnp.broadcast_to(hb_ref[...].astype(jnp.float32), (tb, n_hin))
    vb_b = jnp.broadcast_to(vb_ref[...].astype(jnp.float32), (tb, n_vis))

    # Contract n_vis / n_hin against W in its stored layout (no transpose).
    dn_vh = (((1,), (1,)), ((), ()))   # (tb, n_vis) x (n_hin, n_vis) -> (tb, n_hin)
    dn_hv = (((1,), (0,)), ((), ()))   # (tb, n_hin) x (n_hin, n_vis) -> (tb, n_vis)

    def sample(p, u):
        # 1.0 where p > u else 0.0  (== relu(sign(p - u)), strict inequality).
        return jnp.where(u < p, 1.0, 0.0).astype(jnp.bfloat16)

    def v_to_h(v_bf, u):
        pre = lax.dot_general(v_bf, W, dn_vh,
                              preferred_element_type=jnp.float32) + hb_b
        return sample(jax.nn.sigmoid(pre), u)

    def h_to_v(h_bf, u):
        pre = lax.dot_general(h_bf, W, dn_hv,
                              preferred_element_type=jnp.float32) + vb_b
        return sample(jax.nn.sigmoid(pre), u)

    v0 = v_ref[...].astype(jnp.bfloat16)
    h_ = v_to_h(v0, rh_ref[0])

    # Static (unrolled) Gibbs chain; k is a compile-time constant (k >= 1).
    v_ = v0
    for step in range(k):
        v_ = h_to_v(h_, rv_ref[step])
        h_ = v_to_h(v_, rh_ref[step + 1])

    v_out_ref[...] = v_.astype(v_out_ref.dtype)
    h_out_ref[...] = h_.astype(h_out_ref.dtype)


def rbm_forward(v, W, h_bias, v_bias, key, k, *, batch_tile=None):
    """Returns (v, v_, h_) like RBM.forward (tensorization=None)."""
    B, n_vis = v.shape
    n_hin = W.shape[0]
    assert k >= 1, "k must be >= 1 (matches the PyTorch forward)"

    if batch_tile is None:
        batch_tile = min(B, 256)          # shrink (e.g. 128/256) for v7x VMEM budgets
    assert B % batch_tile == 0
    grid = (B // batch_tile,)

    # Host-side uniforms: one (B, n_hin) draw per v->h pass, one (B, n_vis) per h->v.
    kh, kv = jax.random.split(key)
    rand_h = jax.random.uniform(kh, (k + 1, B, n_hin), dtype=jnp.float32)
    rand_v = jax.random.uniform(kv, (k, B, n_vis), dtype=jnp.float32)

    hb2d = h_bias.reshape(1, n_hin).astype(jnp.float32)
    vb2d = v_bias.reshape(1, n_vis).astype(jnp.float32)
    W_bf = W.astype(jnp.bfloat16)         # halves W HBM traffic / VMEM residency
    v_f32 = v.astype(jnp.float32)

    kernel = functools.partial(rbm_kernel, k=k)

    v_, h_ = pl.pallas_call(
        kernel,
        out_shape=(
            jax.ShapeDtypeStruct((B, n_vis), jnp.float32),
            jax.ShapeDtypeStruct((B, n_hin), jnp.float32),
        ),
        grid=grid,
        in_specs=[
            pl.BlockSpec((batch_tile, n_vis), lambda i: (i, 0)),            # v tile
            pl.BlockSpec((n_hin, n_vis), lambda i: (0, 0)),                 # W (resident)
            pl.BlockSpec((1, n_hin), lambda i: (0, 0)),                     # h_bias
            pl.BlockSpec((1, n_vis), lambda i: (0, 0)),                     # v_bias
            pl.BlockSpec((k + 1, batch_tile, n_hin), lambda i: (0, i, 0)),  # rand_h
            pl.BlockSpec((k, batch_tile, n_vis), lambda i: (0, i, 0)),      # rand_v
        ],
        out_specs=(
            pl.BlockSpec((batch_tile, n_vis), lambda i: (i, 0)),
            pl.BlockSpec((batch_tile, n_hin), lambda i: (i, 0)),
        ),
        compiler_params=pltpu.CompilerParams(
            dimension_semantics=("parallel",),   # shards batch tiles across TCs on v7x
        ),
    )(v_f32, W_bf, hb2d, vb2d, rand_h, rand_v)

    return v, v_, h_


if __name__ == "__main__":
    # Small, TPU-tile-friendly shapes consistent with the module's n_vis/n_hin params.
    # NOTE: batch=8 starves the MXU; real workloads should use batch tiles of
    # 128 (v5e) / 256 (v6e, v7x) rows.
    batch, n_vis, n_hin, k = 8, 256, 128, 5

    key = jax.random.PRNGKey(0)
    k_w, k_v, k_rng = jax.random.split(key, 3)

    # Deterministic parameter init mirroring RBM.__init__ (tensorization=None):
    #   W ~ 0.01 * N(0, 1),  h_bias = 0,  v_bias = 0
    W = 0.01 * jax.random.normal(k_w, (n_hin, n_vis), dtype=jnp.float32)
    h_bias = jnp.zeros((n_hin,), dtype=jnp.float32)
    v_bias = jnp.zeros((n_vis,), dtype=jnp.float32)

    # Binary visible input (like thresholded MNIST pixels), deterministic.
    v = (jax.random.uniform(k_v, (batch, n_vis)) > 0.5).astype(jnp.float32)

    v_in, v_samp, h_samp = rbm_forward(v, W, h_bias, v_bias, key=k_rng, k=k)
    jax.block_until_ready((v_in, v_samp, h_samp))

    assert v_in.shape == (batch, n_vis)
    assert v_samp.shape == (batch, n_vis)
    assert h_samp.shape == (batch, n_hin)
    # Samples are binary {0, 1} by construction of the Bernoulli compare.
    assert bool(jnp.all((v_samp == 0.0) | (v_samp == 1.0)))
    assert bool(jnp.all((h_samp == 0.0) | (h_samp == 1.0)))

    print("KERNEL_OK")
</pallas_src>

<mosaic_0001>
module attributes {stable_mosaic.version = 11 : i64} {
  func.func @rbm_kernel(%arg0: i32, %arg1: memref<8x256xf32, #tpu.memory_space<vmem>>, %arg2: memref<128x256xbf16, #tpu.memory_space<vmem>>, %arg3: memref<1x128xf32, #tpu.memory_space<vmem>>, %arg4: memref<1x256xf32, #tpu.memory_space<vmem>>, %arg5: memref<6x8x128xf32, #tpu.memory_space<vmem>>, %arg6: memref<5x8x256xf32, #tpu.memory_space<vmem>>, %arg7: memref<8x256xf32, #tpu.memory_space<vmem>>, %arg8: memref<8x128xf32, #tpu.memory_space<vmem>>) attributes {dimension_semantics = [#tpu.dimension_semantics<parallel>], iteration_bounds = array<i64: 1>, scalar_prefetch = 0 : i64, scratch_operands = 0 : i64, tpu.core_type = #tpu.core_type<tc>, window_params = [{transform_indices = @transform_0, window_bounds = array<i64: 8, 256>}, {pipeline_mode = #tpu.pipeline_mode<synchronous>, transform_indices = @transform_1, window_bounds = array<i64: 128, 256>}, {pipeline_mode = #tpu.pipeline_mode<synchronous>, transform_indices = @transform_2, window_bounds = array<i64: 1, 128>}, {pipeline_mode = #tpu.pipeline_mode<synchronous>, transform_indices = @transform_3, window_bounds = array<i64: 1, 256>}, {transform_indices = @transform_4, window_bounds = array<i64: 6, 8, 128>}, {transform_indices = @transform_5, window_bounds = array<i64: 5, 8, 256>}, {transform_indices = @transform_6, window_bounds = array<i64: 8, 256>}, {transform_indices = @transform_7, window_bounds = array<i64: 8, 128>}]} {
    %c0 = arith.constant 0 : index
    %c0_0 = arith.constant 0 : index
    %0 = vector.load %arg2[%c0, %c0_0] : memref<128x256xbf16, #tpu.memory_space<vmem>>, vector<128x256xbf16>
    %c0_1 = arith.constant 0 : index
    %c0_2 = arith.constant 0 : index
    %1 = vector.load %arg3[%c0_1, %c0_2] : memref<1x128xf32, #tpu.memory_space<vmem>>, vector<1x128xf32>
    %2 = vector.shape_cast %1 : vector<1x128xf32> to vector<1x128xf32>
    %3 = vector.broadcast %2 : vector<1x128xf32> to vector<8x128xf32>
    %c0_3 = arith.constant 0 : index
    %c0_4 = arith.constant 0 : index
    %4 = vector.load %arg4[%c0_3, %c0_4] : memref<1x256xf32, #tpu.memory_space<vmem>>, vector<1x256xf32>
    %5 = vector.shape_cast %4 : vector<1x256xf32> to vector<1x256xf32>
    %6 = vector.broadcast %5 : vector<1x256xf32> to vector<8x256xf32>
    %c0_5 = arith.constant 0 : index
    %c0_6 = arith.constant 0 : index
    %7 = vector.load %arg1[%c0_5, %c0_6] : memref<8x256xf32, #tpu.memory_space<vmem>>, vector<8x256xf32>
    %8 = arith.truncf %7 : vector<8x256xf32> to vector<8x256xbf16>
    %c0_7 = arith.constant 0 : index
    %c0_8 = arith.constant 0 : index
    %c0_9 = arith.constant 0 : index
    %9 = vector.load %arg5[%c0_7, %c0_8, %c0_9] : memref<6x8x128xf32, #tpu.memory_space<vmem>>, vector<1x8x128xf32>
    %10 = vector.shape_cast %9 : vector<1x8x128xf32> to vector<8x128xf32>
    %cst = arith.constant dense<0.000000e+00> : vector<8x128xf32>
    %11 = tpu.matmul %8, %0, %cst {dimension_numbers = #tpu.dot_dimension_numbers<[1], [1], [0], [0], [0, 0, 1, 0], [], []>} : vector<8x256xbf16>, vector<128x256xbf16>, vector<8x128xf32> -> vector<8x128xf32>
    %12 = arith.addf %11, %3 : vector<8x128xf32>
    %13 = arith.negf %12 : vector<8x128xf32>
    %14 = math.exp %13 : vector<8x128xf32>
    %cst_10 = arith.constant 1.000000e+00 : f32
    %15 = vector.broadcast %cst_10 : f32 to vector<8x128xf32>
    %16 = arith.addf %15, %14 : vector<8x128xf32>
    %17 = arith.divf %15, %16 : vector<8x128xf32>
    %18 = arith.cmpf olt, %10, %17 : vector<8x128xf32>
    %cst_11 = arith.constant 1.000000e+00 : f32
    %cst_12 = arith.constant 0.000000e+00 : f32
    %19 = vector.broadcast %cst_11 : f32 to vector<8x128xf32>
    %20 = vector.broadcast %cst_12 : f32 to vector<8x128xf32>
    %21 = arith.select %18, %19, %20 : vector<8x128xi1>, vector<8x128xf32>
    %22 = arith.truncf %21 : vector<8x128xf32> to vector<8x128xbf16>
    %c0_13 = arith.constant 0 : index
    %c0_14 = arith.constant 0 : index
    %c0_15 = arith.constant 0 : index
    %23 = vector.load %arg6[%c0_13, %c0_14, %c0_15] : memref<5x8x256xf32, #tpu.memory_space<vmem>>, vector<1x8x256xf32>
    %24 = vector.shape_cast %23 : vector<1x8x256xf32> to vector<8x256xf32>
    %cst_16 = arith.constant dense<0.000000e+00> : vector<8x256xf32>
    %25 = tpu.matmul %22, %0, %cst_16 {dimension_numbers = #tpu.dot_dimension_numbers<[1], [0], [0], [1], [0, 0, 1, 1], [], []>} : vector<8x128xbf16>, vector<128x256xbf16>, vector<8x256xf32> -> vector<8x256xf32>
    %26 = arith.addf %25, %6 : vector<8x256xf32>
    %27 = arith.negf %26 : vector<8x256xf32>
    %28 = math.exp %27 : vector<8x256xf32>
    %cst_17 = arith.constant 1.000000e+00 : f32
    %29 = vector.broadcast %cst_17 : f32 to vector<8x256xf32>
    %30 = arith.addf %29, %28 : vector<8x256xf32>
    %31 = arith.divf %29, %30 : vector<8x256xf32>
    %32 = arith.cmpf olt, %24, %31 : vector<8x256xf32>
    %cst_18 = arith.constant 1.000000e+00 : f32
    %cst_19 = arith.constant 0.000000e+00 : f32
    %33 = vector.broadcast %cst_18 : f32 to vector<8x256xf32>
    %34 = vector.broadcast %cst_19 : f32 to vector<8x256xf32>
    %35 = arith.select %32, %33, %34 : vector<8x256xi1>, vector<8x256xf32>
    %36 = arith.truncf %35 : vector<8x256xf32> to vector<8x256xbf16>
    %c1 = arith.constant 1 : index
    %c0_20 = arith.constant 0 : index
    %c0_21 = arith.constant 0 : index
    %37 = vector.load %arg5[%c1, %c0_20, %c0_21] : memref<6x8x128xf32, #tpu.memory_space<vmem>>, vector<1x8x128xf32>
    %38 = vector.shape_cast %37 : vector<1x8x128xf32> to vector<8x128xf32>
    %cst_22 = arith.constant dense<0.000000e+00> : vector<8x128xf32>
    %39 = tpu.matmul %36, %0, %cst_22 {dimension_numbers = #tpu.dot_dimension_numbers<[1], [1], [0], [0], [0, 0, 1, 0], [], []>} : vector<8x256xbf16>, vector<128x256xbf16>, vector<8x128xf32> -> vector<8x128xf32>
    %40 = arith.addf %39, %3 : vector<8x128xf32>
    %41 = arith.negf %40 : vector<8x128xf32>
    %42 = math.exp %41 : vector<8x128xf32>
    %cst_23 = arith.constant 1.000000e+00 : f32
    %43 = vector.broadcast %cst_23 : f32 to vector<8x128xf32>
    %44 = arith.addf %43, %42 : vector<8x128xf32>
    %45 = arith.divf %43, %44 : vector<8x128xf32>
    %46 = arith.cmpf olt, %38, %45 : vector<8x128xf32>
    %cst_24 = arith.constant 1.000000e+00 : f32
    %cst_25 = arith.constant 0.000000e+00 : f32
    %47 = vector.broadcast %cst_24 : f32 to vector<8x128xf32>
    %48 = vector.broadcast %cst_25 : f32 to vector<8x128xf32>
    %49 = arith.select %46, %47, %48 : vector<8x128xi1>, vector<8x128xf32>
    %50 = arith.truncf %49 : vector<8x128xf32> to vector<8x128xbf16>
    %c1_26 = arith.constant 1 : index
    %c0_27 = arith.constant 0 : index
    %c0_28 = arith.constant 0 : index
    %51 = vector.load %arg6[%c1_26, %c0_27, %c0_28] : memref<5x8x256xf32, #tpu.memory_space<vmem>>, vector<1x8x256xf32>
    %52 = vector.shape_cast %51 : vector<1x8x256xf32> to vector<8x256xf32>
    %cst_29 = arith.constant dense<0.000000e+00> : vector<8x256xf32>
    %53 = tpu.matmul %50, %0, %cst_29 {dimension_numbers = #tpu.dot_dimension_numbers<[1], [0], [0], [1], [0, 0, 1, 1], [], []>} : vector<8x128xbf16>, vector<128x256xbf16>, vector<8x256xf32> -> vector<8x256xf32>
    %54 = arith.addf %53, %6 : vector<8x256xf32>
    %55 = arith.negf %54 : vector<8x256xf32>
    %56 = math.exp %55 : vector<8x256xf32>
    %cst_30 = arith.constant 1.000000e+00 : f32
    %57 = vector.broadcast %cst_30 : f32 to vector<8x256xf32>
    %58 = arith.addf %57, %56 : vector<8x256xf32>
    %59 = arith.divf %57, %58 : vector<8x256xf32>
    %60 = arith.cmpf olt, %52, %59 : vector<8x256xf32>
    %cst_31 = arith.constant 1.000000e+00 : f32
    %cst_32 = arith.constant 0.000000e+00 : f32
    %61 = vector.broadcast %cst_31 : f32 to vector<8x256xf32>
    %62 = vector.broadcast %cst_32 : f32 to vector<8x256xf32>
    %63 = arith.select %60, %61, %62 : vector<8x256xi1>, vector<8x256xf32>
    %64 = arith.truncf %63 : vector<8x256xf32> to vector<8x256xbf16>
    %c2 = arith.constant 2 : index
    %c0_33 = arith.constant 0 : index
    %c0_34 = arith.constant 0 : index
    %65 = vector.load %arg5[%c2, %c0_33, %c0_34] : memref<6x8x128xf32, #tpu.memory_space<vmem>>, vector<1x8x128xf32>
    %66 = vector.shape_cast %65 : vector<1x8x128xf32> to vector<8x128xf32>
    %cst_35 = arith.constant dense<0.000000e+00> : vector<8x128xf32>
    %67 = tpu.matmul %64, %0, %cst_35 {dimension_numbers = #tpu.dot_dimension_numbers<[1], [1], [0], [0], [0, 0, 1, 0], [], []>} : vector<8x256xbf16>, vector<128x256xbf16>, vector<8x128xf32> -> vector<8x128xf32>
    %68 = arith.addf %67, %3 : vector<8x128xf32>
    %69 = arith.negf %68 : vector<8x128xf32>
    %70 = math.exp %69 : vector<8x128xf32>
    %cst_36 = arith.constant 1.000000e+00 : f32
    %71 = vector.broadcast %cst_36 : f32 to vector<8x128xf32>
    %72 = arith.addf %71, %70 : vector<8x128xf32>
    %73 = arith.divf %71, %72 : vector<8x128xf32>
    %74 = arith.cmpf olt, %66, %73 : vector<8x128xf32>
    %cst_37 = arith.constant 1.000000e+00 : f32
    %cst_38 = arith.constant 0.000000e+00 : f32
    %75 = vector.broadcast %cst_37 : f32 to vector<8x128xf32>
    %76 = vector.broadcast %cst_38 : f32 to vector<8x128xf32>
    %77 = arith.select %74, %75, %76 : vector<8x128xi1>, vector<8x128xf32>
    %78 = arith.truncf %77 : vector<8x128xf32> to vector<8x128xbf16>
    %c2_39 = arith.constant 2 : index
    %c0_40 = arith.constant 0 : index
    %c0_41 = arith.constant 0 : index
    %79 = vector.load %arg6[%c2_39, %c0_40, %c0_41] : memref<5x8x256xf32, #tpu.memory_space<vmem>>, vector<1x8x256xf32>
    %80 = vector.shape_cast %79 : vector<1x8x256xf32> to vector<8x256xf32>
    %cst_42 = arith.constant dense<0.000000e+00> : vector<8x256xf32>
    %81 = tpu.matmul %78, %0, %cst_42 {dimension_numbers = #tpu.dot_dimension_numbers<[1], [0], [0], [1], [0, 0, 1, 1], [], []>} : vector<8x128xbf16>, vector<128x256xbf16>, vector<8x256xf32> -> vector<8x256xf32>
    %82 = arith.addf %81, %6 : vector<8x256xf32>
    %83 = arith.negf %82 : vector<8x256xf32>
    %84 = math.exp %83 : vector<8x256xf32>
    %cst_43 = arith.constant 1.000000e+00 : f32
    %85 = vector.broadcast %cst_43 : f32 to vector<8x256xf32>
    %86 = arith.addf %85, %84 : vector<8x256xf32>
    %87 = arith.divf %85, %86 : vector<8x256xf32>
    %88 = arith.cmpf olt, %80, %87 : vector<8x256xf32>
    %cst_44 = arith.constant 1.000000e+00 : f32
    %cst_45 = arith.constant 0.000000e+00 : f32
    %89 = vector.broadcast %cst_44 : f32 to vector<8x256xf32>
    %90 = vector.broadcast %cst_45 : f32 to vector<8x256xf32>
    %91 = arith.select %88, %89, %90 : vector<8x256xi1>, vector<8x256xf32>
    %92 = arith.truncf %91 : vector<8x256xf32> to vector<8x256xbf16>
    %c3 = arith.constant 3 : index
    %c0_46 = arith.constant 0 : index
    %c0_47 = arith.constant 0 : index
    %93 = vector.load %arg5[%c3, %c0_46, %c0_47] : memref<6x8x128xf32, #tpu.memory_space<vmem>>, vector<1x8x128xf32>
    %94 = vector.shape_cast %93 : vector<1x8x128xf32> to vector<8x128xf32>
    %cst_48 = arith.constant dense<0.000000e+00> : vector<8x128xf32>
    %95 = tpu.matmul %92, %0, %cst_48 {dimension_numbers = #tpu.dot_dimension_numbers<[1], [1], [0], [0], [0, 0, 1, 0], [], []>} : vector<8x256xbf16>, vector<128x256xbf16>, vector<8x128xf32> -> vector<8x128xf32>
    %96 = arith.addf %95, %3 : vector<8x128xf32>
    %97 = arith.negf %96 : vector<8x128xf32>
    %98 = math.exp %97 : vector<8x128xf32>
    %cst_49 = arith.constant 1.000000e+00 : f32
    %99 = vector.broadcast %cst_49 : f32 to vector<8x128xf32>
    %100 = arith.addf %99, %98 : vector<8x128xf32>
    %101 = arith.divf %99, %100 : vector<8x128xf32>
    %102 = arith.cmpf olt, %94, %101 : vector<8x128xf32>
    %cst_50 = arith.constant 1.000000e+00 : f32
    %cst_51 = arith.constant 0.000000e+00 : f32
    %103 = vector.broadcast %cst_50 : f32 to vector<8x128xf32>
    %104 = vector.broadcast %cst_51 : f32 to vector<8x128xf32>
    %105 = arith.select %102, %103, %104 : vector<8x128xi1>, vector<8x128xf32>
    %106 = arith.truncf %105 : vector<8x128xf32> to vector<8x128xbf16>
    %c3_52 = arith.constant 3 : index
    %c0_53 = arith.constant 0 : index
    %c0_54 = arith.constant 0 : index
    %107 = vector.load %arg6[%c3_52, %c0_53, %c0_54] : memref<5x8x256xf32, #tpu.memory_space<vmem>>, vector<1x8x256xf32>
    %108 = vector.shape_cast %107 : vector<1x8x256xf32> to vector<8x256xf32>
    %cst_55 = arith.constant dense<0.000000e+00> : vector<8x256xf32>
    %109 = tpu.matmul %106, %0, %cst_55 {dimension_numbers = #tpu.dot_dimension_numbers<[1], [0], [0], [1], [0, 0, 1, 1], [], []>} : vector<8x128xbf16>, vector<128x256xbf16>, vector<8x256xf32> -> vector<8x256xf32>
    %110 = arith.addf %109, %6 : vector<8x256xf32>
    %111 = arith.negf %110 : vector<8x256xf32>
    %112 = math.exp %111 : vector<8x256xf32>
    %cst_56 = arith.constant 1.000000e+00 : f32
    %113 = vector.broadcast %cst_56 : f32 to vector<8x256xf32>
    %114 = arith.addf %113, %112 : vector<8x256xf32>
    %115 = arith.divf %113, %114 : vector<8x256xf32>
    %116 = arith.cmpf olt, %108, %115 : vector<8x256xf32>
    %cst_57 = arith.constant 1.000000e+00 : f32
    %cst_58 = arith.constant 0.000000e+00 : f32
    %117 = vector.broadcast %cst_57 : f32 to vector<8x256xf32>
    %118 = vector.broadcast %cst_58 : f32 to vector<8x256xf32>
    %119 = arith.select %116, %117, %118 : vector<8x256xi1>, vector<8x256xf32>
    %120 = arith.truncf %119 : vector<8x256xf32> to vector<8x256xbf16>
    %c4 = arith.constant 4 : index
    %c0_59 = arith.constant 0 : index
    %c0_60 = arith.constant 0 : index
    %121 = vector.load %arg5[%c4, %c0_59, %c0_60] : memref<6x8x128xf32, #tpu.memory_space<vmem>>, vector<1x8x128xf32>
    %122 = vector.shape_cast %121 : vector<1x8x128xf32> to vector<8x128xf32>
    %cst_61 = arith.constant dense<0.000000e+00> : vector<8x128xf32>
    %123 = tpu.matmul %120, %0, %cst_61 {dimension_numbers = #tpu.dot_dimension_numbers<[1], [1], [0], [0], [0, 0, 1, 0], [], []>} : vector<8x256xbf16>, vector<128x256xbf16>, vector<8x128xf32> -> vector<8x128xf32>
    %124 = arith.addf %123, %3 : vector<8x128xf32>
    %125 = arith.negf %124 : vector<8x128xf32>
    %126 = math.exp %125 : vector<8x128xf32>
    %cst_62 = arith.constant 1.000000e+00 : f32
    %127 = vector.broadcast %cst_62 : f32 to vector<8x128xf32>
    %128 = arith.addf %127, %126 : vector<8x128xf32>
    %129 = arith.divf %127, %128 : vector<8x128xf32>
    %130 = arith.cmpf olt, %122, %129 : vector<8x128xf32>
    %cst_63 = arith.constant 1.000000e+00 : f32
    %cst_64 = arith.constant 0.000000e+00 : f32
    %131 = vector.broadcast %cst_63 : f32 to vector<8x128xf32>
    %132 = vector.broadcast %cst_64 : f32 to vector<8x128xf32>
    %133 = arith.select %130, %131, %132 : vector<8x128xi1>, vector<8x128xf32>
    %134 = arith.truncf %133 : vector<8x128xf32> to vector<8x128xbf16>
    %c4_65 = arith.constant 4 : index
    %c0_66 = arith.constant 0 : index
    %c0_67 = arith.constant 0 : index
    %135 = vector.load %arg6[%c4_65, %c0_66, %c0_67] : memref<5x8x256xf32, #tpu.memory_space<vmem>>, vector<1x8x256xf32>
    %136 = vector.shape_cast %135 : vector<1x8x256xf32> to vector<8x256xf32>
    %cst_68 = arith.constant dense<0.000000e+00> : vector<8x256xf32>
    %137 = tpu.matmul %134, %0, %cst_68 {dimension_numbers = #tpu.dot_dimension_numbers<[1], [0], [0], [1], [0, 0, 1, 1], [], []>} : vector<8x128xbf16>, vector<128x256xbf16>, vector<8x256xf32> -> vector<8x256xf32>
    %138 = arith.addf %137, %6 : vector<8x256xf32>
    %139 = arith.negf %138 : vector<8x256xf32>
    %140 = math.exp %139 : vector<8x256xf32>
    %cst_69 = arith.constant 1.000000e+00 : f32
    %141 = vector.broadcast %cst_69 : f32 to vector<8x256xf32>
    %142 = arith.addf %141, %140 : vector<8x256xf32>
    %143 = arith.divf %141, %142 : vector<8x256xf32>
    %144 = arith.cmpf olt, %136, %143 : vector<8x256xf32>
    %cst_70 = arith.constant 1.000000e+00 : f32
    %cst_71 = arith.constant 0.000000e+00 : f32
    %145 = vector.broadcast %cst_70 : f32 to vector<8x256xf32>
    %146 = vector.broadcast %cst_71 : f32 to vector<8x256xf32>
    %147 = arith.select %144, %145, %146 : vector<8x256xi1>, vector<8x256xf32>
    %148 = arith.truncf %147 : vector<8x256xf32> to vector<8x256xbf16>
    %c5 = arith.constant 5 : index
    %c0_72 = arith.constant 0 : index
    %c0_73 = arith.constant 0 : index
    %149 = vector.load %arg5[%c5, %c0_72, %c0_73] : memref<6x8x128xf32, #tpu.memory_space<vmem>>, vector<1x8x128xf32>
    %150 = vector.shape_cast %149 : vector<1x8x128xf32> to vector<8x128xf32>
    %cst_74 = arith.constant dense<0.000000e+00> : vector<8x128xf32>
    %151 = tpu.matmul %148, %0, %cst_74 {dimension_numbers = #tpu.dot_dimension_numbers<[1], [1], [0], [0], [0, 0, 1, 0], [], []>} : vector<8x256xbf16>, vector<128x256xbf16>, vector<8x128xf32> -> vector<8x128xf32>
    %152 = arith.addf %151, %3 : vector<8x128xf32>
    %153 = arith.negf %152 : vector<8x128xf32>
    %154 = math.exp %153 : vector<8x128xf32>
    %cst_75 = arith.constant 1.000000e+00 : f32
    %155 = vector.broadcast %cst_75 : f32 to vector<8x128xf32>
    %156 = arith.addf %155, %154 : vector<8x128xf32>
    %157 = arith.divf %155, %156 : vector<8x128xf32>
    %158 = arith.cmpf olt, %150, %157 : vector<8x128xf32>
    %cst_76 = arith.constant 1.000000e+00 : f32
    %cst_77 = arith.constant 0.000000e+00 : f32
    %159 = vector.broadcast %cst_76 : f32 to vector<8x128xf32>
    %160 = vector.broadcast %cst_77 : f32 to vector<8x128xf32>
    %161 = arith.select %158, %159, %160 : vector<8x128xi1>, vector<8x128xf32>
    %162 = arith.truncf %161 : vector<8x128xf32> to vector<8x128xbf16>
    %163 = arith.extf %148 : vector<8x256xbf16> to vector<8x256xf32>
    %c0_78 = arith.constant 0 : index
    %c0_79 = arith.constant 0 : index
    %164 = vector.load %arg7[%c0_78, %c0_79] : memref<8x256xf32, #tpu.memory_space<vmem>>, vector<8x256xf32>
    tpu.vector_store %arg7[%c0_78, %c0_79], %163 {strides = array<i32>} : memref<8x256xf32, #tpu.memory_space<vmem>>, vector<8x256xf32>,
    %165 = arith.extf %162 : vector<8x128xbf16> to vector<8x128xf32>
    %c0_80 = arith.constant 0 : index
    %c0_81 = arith.constant 0 : index
    %166 = vector.load %arg8[%c0_80, %c0_81] : memref<8x128xf32, #tpu.memory_space<vmem>>, vector<8x128xf32>
    tpu.vector_store %arg8[%c0_80, %c0_81], %165 {strides = array<i32>} : memref<8x128xf32, #tpu.memory_space<vmem>>, vector<8x128xf32>,
    return
  }
  func.func @transform_0(%arg0: i32) -> (i32, i32) {
    %c0_i32 = arith.constant 0 : i32
    %c0_i32_0 = arith.constant 0 : i32
    return %arg0, %c0_i32 : i32, i32
  }
  func.func @transform_1(%arg0: i32) -> (i32, i32) {
    %c0_i32 = arith.constant 0 : i32
    %c0_i32_0 = arith.constant 0 : i32
    %c0_i32_1 = arith.constant 0 : i32
    return %c0_i32, %c0_i32_0 : i32, i32
  }
  func.func @transform_2(%arg0: i32) -> (i32, i32) {
    %c0_i32 = arith.constant 0 : i32
    %c0_i32_0 = arith.constant 0 : i32
    %c0_i32_1 = arith.constant 0 : i32
    return %c0_i32, %c0_i32_0 : i32, i32
  }
  func.func @transform_3(%arg0: i32) -> (i32, i32) {
    %c0_i32 = arith.constant 0 : i32
    %c0_i32_0 = arith.constant 0 : i32
    %c0_i32_1 = arith.constant 0 : i32
    return %c0_i32, %c0_i32_0 : i32, i32
  }
  func.func @transform_4(%arg0: i32) -> (i32, i32, i32) {
    %c0_i32 = arith.constant 0 : i32
    %c0_i32_0 = arith.constant 0 : i32
    %c0_i32_1 = arith.constant 0 : i32
    return %c0_i32, %arg0, %c0_i32_0 : i32, i32, i32
  }
  func.func @transform_5(%arg0: i32) -> (i32, i32, i32) {
    %c0_i32 = arith.constant 0 : i32
    %c0_i32_0 = arith.constant 0 : i32
    %c0_i32_1 = arith.constant 0 : i32
    return %c0_i32, %arg0, %c0_i32_0 : i32, i32, i32
  }
  func.func @transform_6(%arg0: i32) -> (i32, i32) {
    %c0_i32 = arith.constant 0 : i32
    %c0_i32_0 = arith.constant 0 : i32
    return %arg0, %c0_i32 : i32, i32
  }
  func.func @transform_7(%arg0: i32) -> (i32, i32) {
    %c0_i32 = arith.constant 0 : i32
    %c0_i32_0 = arith.constant 0 : i32
    return %arg0, %c0_i32 : i32, i32
  }
}

</mosaic_0001>

<llo_original>
// kernel: tpu_custom_call.1
$region0: #{tpu_custom_call.1}
  #allocation0 [shape = 'u32[]', space=smem, size = 0x4, offset = 0x4, fixed_abs, tag = 'smem constant byte address 0x4 - core index']
  #allocation1 [shape = 'u32[144,128]{1,0:T(1,128)}', space=vmem, size = 0x12000, scoped, tag = 'internal scratch']
  %s0 = inlined_call_operand.hbm [shape: f32[8,256], index: 0, kind: input, shape index: {}]
  %s1 = inlined_call_operand.hbm [shape: bf16[128,256], index: 1, kind: input, shape index: {}]
  %s2 = inlined_call_operand.vmem [shape: f32[1,128], index: 2, kind: input, shape index: {}]
  %s3 = inlined_call_operand.vmem [shape: f32[1,256], index: 3, kind: input, shape index: {}]
  %s4 = inlined_call_operand.hbm [shape: f32[6,8,128], index: 4, kind: input, shape index: {}]
  %s5 = inlined_call_operand.hbm [shape: f32[5,8,256], index: 5, kind: input, shape index: {}]
  %s6 = inlined_call_operand.hbm [shape: f32[8,256], index: 6, kind: output, shape index: {0}]
  %s7 = inlined_call_operand.hbm [shape: f32[8,128], index: 7, kind: output, shape index: {1}]
  %8 = xla_tuple %s6, %s7
  %s9 = sld [smem:[#allocation0]]
  $region58: #{tpu_custom_call.1} parent=0
    _
  %s11 = ssub.s32 1, %s9
  %s12 = scalar_select 0, %s11, %s9
  $region1: #{tpu_custom_call.1} parent=0
    #allocation2 [shape = 'u8[8192]{0}', space=vmem, size = 0x2000, scoped, tag = 'input window, operand 0, single buffered']
    #allocation3 [shape = 's32[1]{0}', space=sflag, size = 0x4, scoped, tag = 'scoped memory for tpu_custom_call.1']
    #allocation4 [shape = 's32[1]{0}', space=sflag, size = 0x4, scoped, tag = 'scoped memory for tpu_custom_call.1']
    #allocation5 [shape = 'u8[65536]{0}', space=vmem, size = 0x10000, scoped, tag = 'input window, operand 1, single buffered']
    #allocation6 [shape = 's32[1]{0}', space=sflag, size = 0x4, scoped, tag = 'scoped memory for tpu_custom_call.1']
    #allocation7 [shape = 'u8[24576]{0}', space=vmem, size = 0x6000, scoped, tag = 'input window, operand 4, single buffered']
    #allocation8 [shape = 'u8[40960]{0}', space=vmem, size = 0xa000, scoped, tag = 'input window, operand 5, single buffered']
    #allocation9 [shape = 's32[1]{0}', space=sflag, size = 0x4, scoped, tag = 'scoped memory for tpu_custom_call.1']
    #allocation10 [shape = 'u8[8192]{0}', space=vmem, size = 0x2000, scoped, tag = 'output window, operand 0, single buffered']
    #allocation11 [shape = 'u8[4096]{0}', space=vmem, size = 0x1000, scoped, tag = 'output window, operand 1, single buffered']
    #allocation12 [shape = 's32[1]{0}', space=sflag, size = 0x4, scoped, tag = 'scoped memory for tpu_custom_call.1']
    %13 = vsyncpa [#allocation3], 0
    %14 = vsyncpa [#allocation6], 0
    %15 = vsyncpa [#allocation9], 0
    %16 = vsyncpa [#allocation4], 0
    %17 = vsyncpa [#allocation12], 0
    // Predicated region
    $region2: #{tpu_custom_call.1} parent=1 // pred_check
      _
    $region3: #{tpu_custom_call.1} parent=1 // pred_check_branch
      %19 = sbr.rel (0) target = $region5
    $region4: #{tpu_custom_call.1} parent=1 // pred_region
      %s21 = ssub.s32 256, 256
      %22 = vsyncadd [#allocation3], %s21
      %s24 = sshll.u32 [#allocation2], 4
      %s25 = int_to_ptr.vmem [resolvable:$true] %s24
      %27 = dma.hbm_to_vmem [thread:$0]  %s0, 256, %s25, [#allocation3]
    $region5: #{tpu_custom_call.1} parent=1 // pred_fallthru
      _
    // Predicated region
    $region6: #{tpu_custom_call.1} parent=1 // pred_check
      _
    $region7: #{tpu_custom_call.1} parent=1 // pred_check_branch
      %29 = sbr.rel (0) target = $region9
    $region8: #{tpu_custom_call.1} parent=1 // pred_region
      %s31 = ssub.s32 2048, 2048
      %32 = vsyncadd [#allocation6], %s31
      %s33 = sshll.u32 [#allocation5], 4
      %s34 = int_to_ptr.vmem [resolvable:$true] %s33
      %39 = dma.hbm_to_vmem [thread:$0]  %s1, 2048, %s34, [#allocation6], 128, 128, 8
    $region9: #{tpu_custom_call.1} parent=1 // pred_fallthru
      _
    // Predicated region
    $region10: #{tpu_custom_call.1} parent=1 // pred_check
      _
    $region11: #{tpu_custom_call.1} parent=1 // pred_check_branch
      %41 = sbr.rel (0) target = $region13
    $region12: #{tpu_custom_call.1} parent=1 // pred_region
      _
    $region13: #{tpu_custom_call.1} parent=1 // pred_fallthru
      _
    // Predicated region
    $region14: #{tpu_custom_call.1} parent=1 // pred_check
      _
    $region15: #{tpu_custom_call.1} parent=1 // pred_check_branch
      %43 = sbr.rel (0) target = $region17
    $region16: #{tpu_custom_call.1} parent=1 // pred_region
      _
    $region17: #{tpu_custom_call.1} parent=1 // pred_fallthru
      _
    // Predicated region
    $region18: #{tpu_custom_call.1} parent=1 // pred_check
      _
    $region19: #{tpu_custom_call.1} parent=1 // pred_check_branch
      %45 = sbr.rel (0) target = $region21
    $region20: #{tpu_custom_call.1} parent=1 // pred_region
      %s47 = ssub.s32 768, 768
      %48 = vsyncadd [#allocation6], %s47
      %s49 = sshll.u32 [#allocation7], 4
      %s50 = int_to_ptr.vmem [resolvable:$true] %s49
      %55 = dma.hbm_to_vmem [thread:$0]  %s4, 768, %s50, [#allocation6], 128, 128, 8
    $region21: #{tpu_custom_call.1} parent=1 // pred_fallthru
      _
    // Predicated region
    $region22: #{tpu_custom_call.1} parent=1 // pred_check
      _
    $region23: #{tpu_custom_call.1} parent=1 // pred_check_branch
      %57 = sbr.rel (0) target = $region25
    $region24: #{tpu_custom_call.1} parent=1 // pred_region
      %s59 = ssub.s32 1280, 1280
      %60 = vsyncadd [#allocation9], %s59
      %s61 = sshll.u32 [#allocation8], 4
      %s62 = int_to_ptr.vmem [resolvable:$true] %s61
      %67 = dma.hbm_to_vmem [thread:$0]  %s5, 1280, %s62, [#allocation9], 256, 256, 16
    $region25: #{tpu_custom_call.1} parent=1 // pred_fallthru
      _
    // Predicated region
    $region26: #{tpu_custom_call.1} parent=1 // pred_check
      _
    $region27: #{tpu_custom_call.1} parent=1 // pred_check_branch
      %69 = sbr.rel (0) target = $region29
    $region28: #{tpu_custom_call.1} parent=1 // pred_region
      %70 = dma.done [#allocation3], 256
    $region29: #{tpu_custom_call.1} parent=1 // pred_fallthru
      _
    // Predicated region
    $region30: #{tpu_custom_call.1} parent=1 // pred_check
      _
    $region31: #{tpu_custom_call.1} parent=1 // pred_check_branch
      %72 = sbr.rel (0) target = $region33
    $region32: #{tpu_custom_call.1} parent=1 // pred_region
      %73 = dma.done [#allocation6], 2048
    $region33: #{tpu_custom_call.1} parent=1 // pred_fallthru
      _
    // Predicated region
    $region34: #{tpu_custom_call.1} parent=1 // pred_check
      _
    $region35: #{tpu_custom_call.1} parent=1 // pred_check_branch
      %75 = sbr.rel (0) target = $region37
    $region36: #{tpu_custom_call.1} parent=1 // pred_region
      %76 = dma.done [#allocation6], 768
    $region37: #{tpu_custom_call.1} parent=1 // pred_fallthru
      _
    // Predicated region
    $region38: #{tpu_custom_call.1} parent=1 // pred_check
      _
    $region39: #{tpu_custom_call.1} parent=1 // pred_check_branch
      %78 = sbr.rel (0) target = $region41
    $region40: #{tpu_custom_call.1} parent=1 // pred_region
      %79 = dma.done [#allocation9], 1280
    $region41: #{tpu_custom_call.1} parent=1 // pred_fallthru
      _
    %v81 = vld [vmem:[#allocation5] sm:$0xff]
    %v82 = vld [vmem:[#allocation5 + $0x8] sm:$0xff]
    %v83 = vld [vmem:[#allocation5 + $0x10] sm:$0xff]
    %v84 = vld [vmem:[#allocation5 + $0x18] sm:$0xff]
    %v85 = vld [vmem:[#allocation5 + $0x20] sm:$0xff]
    %v86 = vld [vmem:[#allocation5 + $0x28] sm:$0xff]
    %v87 = vld [vmem:[#allocation5 + $0x30] sm:$0xff]
    %v88 = vld [vmem:[#allocation5 + $0x38] sm:$0xff]
    %v89 = vld [vmem:[#allocation5 + $0x40] sm:$0xff]
    %v90 = vld [vmem:[#allocation5 + $0x48] sm:$0xff]
    %v91 = vld [vmem:[#allocation5 + $0x50] sm:$0xff]
    %v92 = vld [vmem:[#allocation5 + $0x58] sm:$0xff]
    %v93 = vld [vmem:[#allocation5 + $0x60] sm:$0xff]
    %v94 = vld [vmem:[#allocation5 + $0x68] sm:$0xff]
    %v95 = vld [vmem:[#allocation5 + $0x70] sm:$0xff]
    %v96 = vld [vmem:[#allocation5 + $0x78] sm:$0xff]
    %v97 = vld [vmem:[%s2] sm:$0x1]
    %v99 = vlaneseq
    %v100 = vshrl.u32 %v99, 7
    %v101 = vsub.s32 0, %v100
    %v102 = vrot.slane %v97, %v101
    %v104 = vld [vmem:[%s3] sm:$0x3]
    %v106 = vlaneseq
    %v107 = vshrl.u32 %v106, 7
    %v108 = vsub.s32 0, %v107
    %v109 = vrot.slane %v104, %v108
    %v110 = vlaneseq
    %v111 = vshrl.u32 %v110, 7
    %v112 = vsub.s32 1, %v111
    %v113 = vrot.slane %v104, %v112
    %v116 = vld [vmem:[#allocation2] sm:$0xff]
    %v117 = vld [vmem:[#allocation2 + $0x8] sm:$0xff]
    %v118 = vpack.c.bf16 %v116, %v116
    %v119 = vpack.c.bf16 %v117, %v117
    %v120 = vld [vmem:[#allocation7] sm:$0xff]
    %v137 = vunpack.c.l.b16 %v81
    %v138 = vunpack.c.h.b16 %v81
    %v139 = vunpack.c.l.b16 %v82
    %v140 = vunpack.c.h.b16 %v82
    %v141 = vunpack.c.l.b16 %v83
    %v142 = vunpack.c.h.b16 %v83
    %v143 = vunpack.c.l.b16 %v84
    %v144 = vunpack.c.h.b16 %v84
    %v145 = vunpack.c.l.b16 %v85
    %v146 = vunpack.c.h.b16 %v85
    %v147 = vunpack.c.l.b16 %v86
    %v148 = vunpack.c.h.b16 %v86
    %v149 = vunpack.c.l.b16 %v87
    %v150 = vunpack.c.h.b16 %v87
    %v151 = vunpack.c.l.b16 %v88
    %v152 = vunpack.c.h.b16 %v88
    %v153 = vunpack.c.l.b16 %v89
    %v154 = vunpack.c.h.b16 %v89
    %v155 = vunpack.c.l.b16 %v90
    %v156 = vunpack.c.h.b16 %v90
    %v157 = vunpack.c.l.b16 %v91
    %v158 = vunpack.c.h.b16 %v91
    %v159 = vunpack.c.l.b16 %v92
    %v160 = vunpack.c.h.b16 %v92
    %v161 = vunpack.c.l.b16 %v93
    %v162 = vunpack.c.h.b16 %v93
    %v163 = vunpack.c.l.b16 %v94
    %v164 = vunpack.c.h.b16 %v94
    %v165 = vunpack.c.l.b16 %v95
    %v166 = vunpack.c.h.b16 %v95
    %v167 = vunpack.c.l.b16 %v96
    %v168 = vunpack.c.h.b16 %v96
    %v169 = vpack.c.b16 %v139, %v137
    %v170 = vpack.c.b16 %v140, %v138
    %v171 = vpack.c.b16 %v143, %v141
    %v172 = vpack.c.b16 %v144, %v142
    %v173 = vpack.c.b16 %v147, %v145
    %v174 = vpack.c.b16 %v148, %v146
    %v175 = vpack.c.b16 %v151, %v149
    %v176 = vpack.c.b16 %v152, %v150
    %v177 = vpack.c.b16 %v155, %v153
    %v178 = vpack.c.b16 %v156, %v154
    %v179 = vpack.c.b16 %v159, %v157
    %v180 = vpack.c.b16 %v160, %v158
    %v181 = vpack.c.b16 %v163, %v161
    %v182 = vpack.c.b16 %v164, %v162
    %v183 = vpack.c.b16 %v167, %v165
    %v184 = vpack.c.b16 %v168, %v166
    %201 = vmatprep.subr.bf16.mxu0 %v184
    %202 = vmatpush1.bf16.xpose.msra.mxu0 %v183
    %203 = vmatprep.subr.bf16.mxu0 %v182
    %204 = vmatpush1.bf16.xpose.msra.mxu0 %v181
    %205 = vmatprep.subr.bf16.mxu0 %v180
    %206 = vmatpush1.bf16.xpose.msra.mxu0 %v179
    %207 = vmatprep.subr.bf16.mxu0 %v178
    %208 = vmatpush1.bf16.xpose.msra.mxu0 %v177
    %209 = vmatprep.subr.bf16.mxu0 %v176
    %210 = vmatpush1.bf16.xpose.msra.mxu0 %v175
    %211 = vmatprep.subr.bf16.mxu0 %v174
    %212 = vmatpush1.bf16.xpose.msra.mxu0 %v173
    %213 = vmatprep.subr.bf16.mxu0 %v172
    %214 = vmatpush1.bf16.xpose.msra.mxu0 %v171
    %215 = vmatprep.subr.bf16.mxu0 %v170
    %216 = vmatpush1.bf16.xpose.msra.mxu0 %v169
    %217 = vmatprep.subr.bf16.mxu0 0
    %218 = vmatpush2.bf16.xpose.msra.mxu0 0
    %219 = vmatprep.subr.bf16.mxu0 0
    %220 = vmatpush2.bf16.xpose.msra.mxu0 0
    %221 = vmatprep.subr.bf16.mxu0 0
    %222 = vmatpush2.bf16.xpose.msra.mxu0 0
    %223 = vmatprep.subr.bf16.mxu0 0
    %224 = vmatpush2.bf16.xpose.msra.mxu0 0
    %225 = vmatprep.subr.bf16.mxu0 0
    %226 = vmatpush2.bf16.xpose.msra.mxu0 0
    %227 = vmatprep.subr.bf16.mxu0 0
    %228 = vmatpush2.bf16.xpose.msra.mxu0 0
    %229 = vmatprep.subr.bf16.mxu0 0
    %230 = vmatpush2.bf16.xpose.msra.mxu0 0
    %231 = vmatprep.subr.bf16.mxu0 0
    %232 = vmatpush2.bf16.xpose.msra.mxu0 0
    %233 = vmatprep.mubr.bf16.mxu0 %v119
    %234 = vmatmul.mubr.bf16.gmra.mxu0 %v118
    %v235 = vpop.f32.mrf.mxu0
    %v236 = vadd.f32 %v102, %v235
    %v237 = vpop.f32.mrf.mxu0
    %v238 = vpop.f32.mrf.mxu0
    %v239 = vpop.f32.mrf.mxu0
    %240 = vdwg.mxu0
    %v241 = vxor.u32 %v236, 2147483648
    %v242 = vmul.f32 %v241, 1.442695
    %v243 = vpow.pop %v242
    %v244 = vadd.f32 %v243, 1.0
    %v245 = vrcp.pop %v244
    %v246 = vmul.f32 1.0, %v245
    %vm247 = vcmp.lt.f32.partialorder %v120, %v246
    %v248 = vsel %vm247, 1.0, 0.0
    %v249 = vpack.c.bf16 %v248, %v248
    %v250 = vld [vmem:[#allocation8] sm:$0xff]
    %v251 = vld [vmem:[#allocation8 + $0x8] sm:$0xff]
    %252 = vmatprep.subr.bf16.mxu0 %v184
    %253 = vmatpush1.bf16.msra.mxu0 %v183
    %254 = vmatprep.subr.bf16.mxu0 %v182
    %255 = vmatpush1.bf16.msra.mxu0 %v181
    %256 = vmatprep.subr.bf16.mxu0 %v180
    %257 = vmatpush1.bf16.msra.mxu0 %v179
    %258 = vmatprep.subr.bf16.mxu0 %v178
    %259 = vmatpush1.bf16.msra.mxu0 %v177
    %260 = vmatprep.subr.bf16.mxu0 %v176
    %261 = vmatpush1.bf16.msra.mxu0 %v175
    %262 = vmatprep.subr.bf16.mxu0 %v174
    %263 = vmatpush1.bf16.msra.mxu0 %v173
    %264 = vmatprep.subr.bf16.mxu0 %v172
    %265 = vmatpush1.bf16.msra.mxu0 %v171
    %266 = vmatprep.subr.bf16.mxu0 %v170
    %267 = vmatpush1.bf16.msra.mxu0 %v169
    %268 = vmatprep.subr.bf16.mxu0 0
    %269 = vmatpush2.bf16.msra.mxu0 0
    %270 = vmatprep.subr.bf16.mxu0 0
    %271 = vmatpush2.bf16.msra.mxu0 0
    %272 = vmatprep.subr.bf16.mxu0 0
    %273 = vmatpush2.bf16.msra.mxu0 0
    %274 = vmatprep.subr.bf16.mxu0 0
    %275 = vmatpush2.bf16.msra.mxu0 0
    %276 = vmatprep.subr.bf16.mxu0 0
    %277 = vmatpush2.bf16.msra.mxu0 0
    %278 = vmatprep.subr.bf16.mxu0 0
    %279 = vmatpush2.bf16.msra.mxu0 0
    %280 = vmatprep.subr.bf16.mxu0 0
    %281 = vmatpush2.bf16.msra.mxu0 0
    %282 = vmatprep.subr.bf16.mxu0 0
    %283 = vmatpush2.bf16.msra.mxu0 0
    %284 = vmatprep.mubr.bf16.mxu0 0
    %285 = vmatmul.mubr.bf16.gmra.mxu0 %v249
    %v286 = vpop.f32.mrf.mxu0
    %v287 = vadd.f32 %v109, %v286
    %v288 = vpop.f32.mrf.mxu0
    %v289 = vadd.f32 %v113, %v288
    %v290 = vpop.f32.mrf.mxu0
    %v291 = vpop.f32.mrf.mxu0
    %292 = vdwg.mxu0
    %v293 = vxor.u32 %v287, 2147483648
    %v294 = vxor.u32 %v289, 2147483648
    %v295 = vmul.f32 %v293, 1.442695
    %v296 = vpow.pop %v295
    %v297 = vmul.f32 %v294, 1.442695
    %v298 = vpow.pop %v297
    %v299 = vadd.f32 %v296, 1.0
    %v300 = vadd.f32 %v298, 1.0
    %v301 = vrcp.pop %v299
    %v302 = vmul.f32 1.0, %v301
    %v303 = vrcp.pop %v300
    %v304 = vmul.f32 1.0, %v303
    %vm305 = vcmp.lt.f32.partialorder %v250, %v302
    %vm306 = vcmp.lt.f32.partialorder %v251, %v304
    %v307 = vsel %vm305, 1.0, 0.0
    %v308 = vsel %vm306, 1.0, 0.0
    %v309 = vpack.c.bf16 %v307, %v307
    %v310 = vpack.c.bf16 %v308, %v308
    %s311 = scalar_lea.vmem [#allocation7], 8
    %v312 = vld [vmem:[%s311] sm:$0xff]
    %313 = vmatprep.subr.bf16.mxu0 %v184
    %314 = vmatpush1.bf16.xpose.msra.mxu0 %v183
    %315 = vmatprep.subr.bf16.mxu0 %v182
    %316 = vmatpush1.bf16.xpose.msra.mxu0 %v181
    %317 = vmatprep.subr.bf16.mxu0 %v180
    %318 = vmatpush1.bf16.xpose.msra.mxu0 %v179
    %319 = vmatprep.subr.bf16.mxu0 %v178
    %320 = vmatpush1.bf16.xpose.msra.mxu0 %v177
    %321 = vmatprep.subr.bf16.mxu0 %v176
    %322 = vmatpush1.bf16.xpose.msra.mxu0 %v175
    %323 = vmatprep.subr.bf16.mxu0 %v174
    %324 = vmatpush1.bf16.xpose.msra.mxu0 %v173
    %325 = vmatprep.subr.bf16.mxu0 %v172
    %326 = vmatpush1.bf16.xpose.msra.mxu0 %v171
    %327 = vmatprep.subr.bf16.mxu0 %v170
    %328 = vmatpush1.bf16.xpose.msra.mxu0 %v169
    %329 = vmatprep.subr.bf16.mxu0 0
    %330 = vmatpush2.bf16.xpose.msra.mxu0 0
    %331 = vmatprep.subr.bf16.mxu0 0
    %332 = vmatpush2.bf16.xpose.msra.mxu0 0
    %333 = vmatprep.subr.bf16.mxu0 0
    %334 = vmatpush2.bf16.xpose.msra.mxu0 0
    %335 = vmatprep.subr.bf16.mxu0 0
    %336 = vmatpush2.bf16.xpose.msra.mxu0 0
    %337 = vmatprep.subr.bf16.mxu0 0
    %338 = vmatpush2.bf16.xpose.msra.mxu0 0
    %339 = vmatprep.subr.bf16.mxu0 0
    %340 = vmatpush2.bf16.xpose.msra.mxu0 0
    %341 = vmatprep.subr.bf16.mxu0 0
    %342 = vmatpush2.bf16.xpose.msra.mxu0 0
    %343 = vmatprep.subr.bf16.mxu0 0
    %344 = vmatpush2.bf16.xpose.msra.mxu0 0
    %345 = vmatprep.mubr.bf16.mxu0 %v310
    %346 = vmatmul.mubr.bf16.gmra.mxu0 %v309
    %v347 = vpop.f32.mrf.mxu0
    %v348 = vadd.f32 %v102, %v347
    %v349 = vpop.f32.mrf.mxu0
    %v350 = vpop.f32.mrf.mxu0
    %v351 = vpop.f32.mrf.mxu0
    %352 = vdwg.mxu0
    %v353 = vxor.u32 %v348, 2147483648
    %v354 = vmul.f32 %v353, 1.442695
    %v355 = vpow.pop %v354
    %v356 = vadd.f32 %v355, 1.0
    %v357 = vrcp.pop %v356
    %v358 = vmul.f32 1.0, %v357
    %vm359 = vcmp.lt.f32.partialorder %v312, %v358
    %v360 = vsel %vm359, 1.0, 0.0
    %v361 = vpack.c.bf16 %v360, %v360
    %s362 = scalar_lea.vmem [#allocation8], 16
    %v363 = vld [vmem:[%s362] sm:$0xff]
    %v364 = vld [vmem:[%s362 + $0x8] sm:$0xff]
    %365 = vmatprep.subr.bf16.mxu0 %v184
    %366 = vmatpush1.bf16.msra.mxu0 %v183
    %367 = vmatprep.subr.bf16.mxu0 %v182
    %368 = vmatpush1.bf16.msra.mxu0 %v181
    %369 = vmatprep.subr.bf16.mxu0 %v180
    %370 = vmatpush1.bf16.msra.mxu0 %v179
    %371 = vmatprep.subr.bf16.mxu0 %v178
    %372 = vmatpush1.bf16.msra.mxu0 %v177
    %373 = vmatprep.subr.bf16.mxu0 %v176
    %374 = vmatpush1.bf16.msra.mxu0 %v175
    %375 = vmatprep.subr.bf16.mxu0 %v174
    %376 = vmatpush1.bf16.msra.mxu0 %v173
    %377 = vmatprep.subr.bf16.mxu0 %v172
    %378 = vmatpush1.bf16.msra.mxu0 %v171
    %379 = vmatprep.subr.bf16.mxu0 %v170
    %380 = vmatpush1.bf16.msra.mxu0 %v169
    %381 = vmatprep.subr.bf16.mxu0 0
    %382 = vmatpush2.bf16.msra.mxu0 0
    %383 = vmatprep.subr.bf16.mxu0 0
    %384 = vmatpush2.bf16.msra.mxu0 0
    %385 = vmatprep.subr.bf16.mxu0 0
    %386 = vmatpush2.bf16.msra.mxu0 0
    %387 = vmatprep.subr.bf16.mxu0 0
    %388 = vmatpush2.bf16.msra.mxu0 0
    %389 = vmatprep.subr.bf16.mxu0 0
    %390 = vmatpush2.bf16.msra.mxu0 0
    %391 = vmatprep.subr.bf16.mxu0 0
    %392 = vmatpush2.bf16.msra.mxu0 0
    %393 = vmatprep.subr.bf16.mxu0 0
    %394 = vmatpush2.bf16.msra.mxu0 0
    %395 = vmatprep.subr.bf16.mxu0 0
    %396 = vmatpush2.bf16.msra.mxu0 0
    %397 = vmatprep.mubr.bf16.mxu0 0
    %398 = vmatmul.mubr.bf16.gmra.mxu0 %v361
    %v399 = vpop.f32.mrf.mxu0
    %v400 = vadd.f32 %v109, %v399
    %v401 = vpop.f32.mrf.mxu0
    %v402 = vadd.f32 %v113, %v401
    %v403 = vpop.f32.mrf.mxu0
    %v404 = vpop.f32.mrf.mxu0
    %405 = vdwg.mxu0
    %v406 = vxor.u32 %v400, 2147483648
    %v407 = vxor.u32 %v402, 2147483648
    %v408 = vmul.f32 %v406, 1.442695
    %v409 = vpow.pop %v408
    %v410 = vmul.f32 %v407, 1.442695
    %v411 = vpow.pop %v410
    %v412 = vadd.f32 %v409, 1.0
    %v413 = vadd.f32 %v411, 1.0
    %v414 = vrcp.pop %v412
    %v415 = vmul.f32 1.0, %v414
    %v416 = vrcp.pop %v413
    %v417 = vmul.f32 1.0, %v416
    %vm418 = vcmp.lt.f32.partialorder %v363, %v415
    %vm419 = vcmp.lt.f32.partialorder %v364, %v417
    %v420 = vsel %vm418, 1.0, 0.0
    %v421 = vsel %vm419, 1.0, 0.0
    %v422 = vpack.c.bf16 %v420, %v420
    %v423 = vpack.c.bf16 %v421, %v421
    %s424 = scalar_lea.vmem [#allocation7], 16
    %v425 = vld [vmem:[%s424] sm:$0xff]
    %426 = vmatprep.subr.bf16.mxu0 %v184
    %427 = vmatpush1.bf16.xpose.msra.mxu0 %v183
    %428 = vmatprep.subr.bf16.mxu0 %v182
    %429 = vmatpush1.bf16.xpose.msra.mxu0 %v181
    %430 = vmatprep.subr.bf16.mxu0 %v180
    %431 = vmatpush1.bf16.xpose.msra.mxu0 %v179
    %432 = vmatprep.subr.bf16.mxu0 %v178
    %433 = vmatpush1.bf16.xpose.msra.mxu0 %v177
    %434 = vmatprep.subr.bf16.mxu0 %v176
    %435 = vmatpush1.bf16.xpose.msra.mxu0 %v175
    %436 = vmatprep.subr.bf16.mxu0 %v174
    %437 = vmatpush1.bf16.xpose.msra.mxu0 %v173
    %438 = vmatprep.subr.bf16.mxu0 %v172
    %439 = vmatpush1.bf16.xpose.msra.mxu0 %v171
    %440 = vmatprep.subr.bf16.mxu0 %v170
    %441 = vmatpush1.bf16.xpose.msra.mxu0 %v169
    %442 = vmatprep.subr.bf16.mxu0 0
    %443 = vmatpush2.bf16.xpose.msra.mxu0 0
    %444 = vmatprep.subr.bf16.mxu0 0
    %445 = vmatpush2.bf16.xpose.msra.mxu0 0
    %446 = vmatprep.subr.bf16.mxu0 0
    %447 = vmatpush2.bf16.xpose.msra.mxu0 0
    %448 = vmatprep.subr.bf16.mxu0 0
    %449 = vmatpush2.bf16.xpose.msra.mxu0 0
    %450 = vmatprep.subr.bf16.mxu0 0
    %451 = vmatpush2.bf16.xpose.msra.mxu0 0
    %452 = vmatprep.subr.bf16.mxu0 0
    %453 = vmatpush2.bf16.xpose.msra.mxu0 0
    %454 = vmatprep.subr.bf16.mxu0 0
    %455 = vmatpush2.bf16.xpose.msra.mxu0 0
    %456 = vmatprep.subr.bf16.mxu0 0
    %457 = vmatpush2.bf16.xpose.msra.mxu0 0
    %458 = vmatprep.mubr.bf16.mxu0 %v423
    %459 = vmatmul.mubr.bf16.gmra.mxu0 %v422
    %v460 = vpop.f32.mrf.mxu0
    %v461 = vadd.f32 %v102, %v460
    %v462 = vpop.f32.mrf.mxu0
    %v463 = vpop.f32.mrf.mxu0
    %v464 = vpop.f32.mrf.mxu0
    %465 = vdwg.mxu0
    %v466 = vxor.u32 %v461, 2147483648
    %v467 = vmul.f32 %v466, 1.442695
    %v468 = vpow.pop %v467
    %v469 = vadd.f32 %v468, 1.0
    %v470 = vrcp.pop %v469
    %v471 = vmul.f32 1.0, %v470
    %vm472 = vcmp.lt.f32.partialorder %v425, %v471
    %v473 = vsel %vm472, 1.0, 0.0
    %v474 = vpack.c.bf16 %v473, %v473
    %s475 = scalar_lea.vmem [#allocation8], 32
    %v476 = vld [vmem:[%s475] sm:$0xff]
    %v477 = vld [vmem:[%s475 + $0x8] sm:$0xff]
    %478 = vmatprep.subr.bf16.mxu0 %v184
    %479 = vmatpush1.bf16.msra.mxu0 %v183
    %480 = vmatprep.subr.bf16.mxu0 %v182
    %481 = vmatpush1.bf16.msra.mxu0 %v181
    %482 = vmatprep.subr.bf16.mxu0 %v180
    %483 = vmatpush1.bf16.msra.mxu0 %v179
    %484 = vmatprep.subr.bf16.mxu0 %v178
    %485 = vmatpush1.bf16.msra.mxu0 %v177
    %486 = vmatprep.subr.bf16.mxu0 %v176
    %487 = vmatpush1.bf16.msra.mxu0 %v175
    %488 = vmatprep.subr.bf16.mxu0 %v174
    %489 = vmatpush1.bf16.msra.mxu0 %v173
    %490 = vmatprep.subr.bf16.mxu0 %v172
    %491 = vmatpush1.bf16.msra.mxu0 %v171
    %492 = vmatprep.subr.bf16.mxu0 %v170
    %493 = vmatpush1.bf16.msra.mxu0 %v169
    %494 = vmatprep.subr.bf16.mxu0 0
    %495 = vmatpush2.bf16.msra.mxu0 0
    %496 = vmatprep.subr.bf16.mxu0 0
    %497 = vmatpush2.bf16.msra.mxu0 0
    %498 = vmatprep.subr.bf16.mxu0 0
    %499 = vmatpush2.bf16.msra.mxu0 0
    %500 = vmatprep.subr.bf16.mxu0 0
    %501 = vmatpush2.bf16.msra.mxu0 0
    %502 = vmatprep.subr.bf16.mxu0 0
    %503 = vmatpush2.bf16.msra.mxu0 0
    %504 = vmatprep.subr.bf16.mxu0 0
    %505 = vmatpush2.bf16.msra.mxu0 0
    %506 = vmatprep.subr.bf16.mxu0 0
    %507 = vmatpush2.bf16.msra.mxu0 0
    %508 = vmatprep.subr.bf16.mxu0 0
    %509 = vmatpush2.bf16.msra.mxu0 0
    %510 = vmatprep.mubr.bf16.mxu0 0
    %511 = vmatmul.mubr.bf16.gmra.mxu0 %v474
    %v512 = vpop.f32.mrf.mxu0
    %v513 = vadd.f32 %v109, %v512
    %v514 = vpop.f32.mrf.mxu0
    %v515 = vadd.f32 %v113, %v514
    %v516 = vpop.f32.mrf.mxu0
    %v517 = vpop.f32.mrf.mxu0
    %518 = vdwg.mxu0
    %v519 = vxor.u32 %v513, 2147483648
    %v520 = vxor.u32 %v515, 2147483648
    %v521 = vmul.f32 %v519, 1.442695
    %v522 = vpow.pop %v521
    %v523 = vmul.f32 %v520, 1.442695
    %v524 = vpow.pop %v523
    %v525 = vadd.f32 %v522, 1.0
    %v526 = vadd.f32 %v524, 1.0
    %v527 = vrcp.pop %v525
    %v528 = vmul.f32 1.0, %v527
    %v529 = vrcp.pop %v526
    %v530 = vmul.f32 1.0, %v529
    %vm531 = vcmp.lt.f32.partialorder %v476, %v528
    %vm532 = vcmp.lt.f32.partialorder %v477, %v530
    %v533 = vsel %vm531, 1.0, 0.0
    %v534 = vsel %vm532, 1.0, 0.0
    %v535 = vpack.c.bf16 %v533, %v533
    %v536 = vpack.c.bf16 %v534, %v534
    %s537 = scalar_lea.vmem [#allocation7], 24
    %v538 = vld [vmem:[%s537] sm:$0xff]
    %539 = vmatprep.subr.bf16.mxu0 %v184
    %540 = vmatpush1.bf16.xpose.msra.mxu0 %v183
    %541 = vmatprep.subr.bf16.mxu0 %v182
    %542 = vmatpush1.bf16.xpose.msra.mxu0 %v181
    %543 = vmatprep.subr.bf16.mxu0 %v180
    %544 = vmatpush1.bf16.xpose.msra.mxu0 %v179
    %545 = vmatprep.subr.bf16.mxu0 %v178
    %546 = vmatpush1.bf16.xpose.msra.mxu0 %v177
    %547 = vmatprep.subr.bf16.mxu0 %v176
    %548 = vmatpush1.bf16.xpose.msra.mxu0 %v175
    %549 = vmatprep.subr.bf16.mxu0 %v174
    %550 = vmatpush1.bf16.xpose.msra.mxu0 %v173
    %551 = vmatprep.subr.bf16.mxu0 %v172
    %552 = vmatpush1.bf16.xpose.msra.mxu0 %v171
    %553 = vmatprep.subr.bf16.mxu0 %v170
    %554 = vmatpush1.bf16.xpose.msra.mxu0 %v169
    %555 = vmatprep.subr.bf16.mxu0 0
    %556 = vmatpush2.bf16.xpose.msra.mxu0 0
    %557 = vmatprep.subr.bf16.mxu0 0
    %558 = vmatpush2.bf16.xpose.msra.mxu0 0
    %559 = vmatprep.subr.bf16.mxu0 0
    %560 = vmatpush2.bf16.xpose.msra.mxu0 0
    %561 = vmatprep.subr.bf16.mxu0 0
    %562 = vmatpush2.bf16.xpose.msra.mxu0 0
    %563 = vmatprep.subr.bf16.mxu0 0
    %564 = vmatpush2.bf16.xpose.msra.mxu0 0
    %565 = vmatprep.subr.bf16.mxu0 0
    %566 = vmatpush2.bf16.xpose.msra.mxu0 0
    %567 = vmatprep.subr.bf16.mxu0 0
    %568 = vmatpush2.bf16.xpose.msra.mxu0 0
    %569 = vmatprep.subr.bf16.mxu0 0
    %570 = vmatpush2.bf16.xpose.msra.mxu0 0
    %571 = vmatprep.mubr.bf16.mxu0 %v536
    %572 = vmatmul.mubr.bf16.gmra.mxu0 %v535
    %v573 = vpop.f32.mrf.mxu0
    %v574 = vadd.f32 %v102, %v573
    %v575 = vpop.f32.mrf.mxu0
    %v576 = vpop.f32.mrf.mxu0
    %v577 = vpop.f32.mrf.mxu0
    %578 = vdwg.mxu0
    %v579 = vxor.u32 %v574, 2147483648
    %v580 = vmul.f32 %v579, 1.442695
    %v581 = vpow.pop %v580
    %v582 = vadd.f32 %v581, 1.0
    %v583 = vrcp.pop %v582
    %v584 = vmul.f32 1.0, %v583
    %vm585 = vcmp.lt.f32.partialorder %v538, %v584
    %v586 = vsel %vm585, 1.0, 0.0
    %v587 = vpack.c.bf16 %v586, %v586
    %s588 = scalar_lea.vmem [#allocation8], 48
    %v589 = vld [vmem:[%s588] sm:$0xff]
    %v590 = vld [vmem:[%s588 + $0x8] sm:$0xff]
    %591 = vmatprep.subr.bf16.mxu0 %v184
    %592 = vmatpush1.bf16.msra.mxu0 %v183
    %593 = vmatprep.subr.bf16.mxu0 %v182
    %594 = vmatpush1.bf16.msra.mxu0 %v181
    %595 = vmatprep.subr.bf16.mxu0 %v180
    %596 = vmatpush1.bf16.msra.mxu0 %v179
    %597 = vmatprep.subr.bf16.mxu0 %v178
    %598 = vmatpush1.bf16.msra.mxu0 %v177
    %599 = vmatprep.subr.bf16.mxu0 %v176
    %600 = vmatpush1.bf16.msra.mxu0 %v175
    %601 = vmatprep.subr.bf16.mxu0 %v174
    %602 = vmatpush1.bf16.msra.mxu0 %v173
    %603 = vmatprep.subr.bf16.mxu0 %v172
    %604 = vmatpush1.bf16.msra.mxu0 %v171
    %605 = vmatprep.subr.bf16.mxu0 %v170
    %606 = vmatpush1.bf16.msra.mxu0 %v169
    %607 = vmatprep.subr.bf16.mxu0 0
    %608 = vmatpush2.bf16.msra.mxu0 0
    %609 = vmatprep.subr.bf16.mxu0 0
    %610 = vmatpush2.bf16.msra.mxu0 0
    %611 = vmatprep.subr.bf16.mxu0 0
    %612 = vmatpush2.bf16.msra.mxu0 0
    %613 = vmatprep.subr.bf16.mxu0 0
    %614 = vmatpush2.bf16.msra.mxu0 0
    %615 = vmatprep.subr.bf16.mxu0 0
    %616 = vmatpush2.bf16.msra.mxu0 0
    %617 = vmatprep.subr.bf16.mxu0 0
    %618 = vmatpush2.bf16.msra.mxu0 0
    %619 = vmatprep.subr.bf16.mxu0 0
    %620 = vmatpush2.bf16.msra.mxu0 0
    %621 = vmatprep.subr.bf16.mxu0 0
    %622 = vmatpush2.bf16.msra.mxu0 0
    %623 = vmatprep.mubr.bf16.mxu0 0
    %624 = vmatmul.mubr.bf16.gmra.mxu0 %v587
    %v625 = vpop.f32.mrf.mxu0
    %v626 = vadd.f32 %v109, %v625
    %v627 = vpop.f32.mrf.mxu0
    %v628 = vadd.f32 %v113, %v627
    %v629 = vpop.f32.mrf.mxu0
    %v630 = vpop.f32.mrf.mxu0
    %631 = vdwg.mxu0
    %v632 = vxor.u32 %v626, 2147483648
    %v633 = vxor.u32 %v628, 2147483648
    %v634 = vmul.f32 %v632, 1.442695
    %v635 = vpow.pop %v634
    %v636 = vmul.f32 %v633, 1.442695
    %v637 = vpow.pop %v636
    %v638 = vadd.f32 %v635, 1.0
    %v639 = vadd.f32 %v637, 1.0
    %v640 = vrcp.pop %v638
    %v641 = vmul.f32 1.0, %v640
    %v642 = vrcp.pop %v639
    %v643 = vmul.f32 1.0, %v642
    %vm644 = vcmp.lt.f32.partialorder %v589, %v641
    %vm645 = vcmp.lt.f32.partialorder %v590, %v643
    %v646 = vsel %vm644, 1.0, 0.0
    %v647 = vsel %vm645, 1.0, 0.0
    %v648 = vpack.c.bf16 %v646, %v646
    %v649 = vpack.c.bf16 %v647, %v647
    %s650 = scalar_lea.vmem [#allocation7], 32
    %v651 = vld [vmem:[%s650] sm:$0xff]
    %652 = vmatprep.subr.bf16.mxu0 %v184
    %653 = vmatpush1.bf16.xpose.msra.mxu0 %v183
    %654 = vmatprep.subr.bf16.mxu0 %v182
    %655 = vmatpush1.bf16.xpose.msra.mxu0 %v181
    %656 = vmatprep.subr.bf16.mxu0 %v180
    %657 = vmatpush1.bf16.xpose.msra.mxu0 %v179
    %658 = vmatprep.subr.bf16.mxu0 %v178
    %659 = vmatpush1.bf16.xpose.msra.mxu0 %v177
    %660 = vmatprep.subr.bf16.mxu0 %v176
    %661 = vmatpush1.bf16.xpose.msra.mxu0 %v175
    %662 = vmatprep.subr.bf16.mxu0 %v174
    %663 = vmatpush1.bf16.xpose.msra.mxu0 %v173
    %664 = vmatprep.subr.bf16.mxu0 %v172
    %665 = vmatpush1.bf16.xpose.msra.mxu0 %v171
    %666 = vmatprep.subr.bf16.mxu0 %v170
    %667 = vmatpush1.bf16.xpose.msra.mxu0 %v169
    %668 = vmatprep.subr.bf16.mxu0 0
    %669 = vmatpush2.bf16.xpose.msra.mxu0 0
    %670 = vmatprep.subr.bf16.mxu0 0
    %671 = vmatpush2.bf16.xpose.msra.mxu0 0
    %672 = vmatprep.subr.bf16.mxu0 0
    %673 = vmatpush2.bf16.xpose.msra.mxu0 0
    %674 = vmatprep.subr.bf16.mxu0 0
    %675 = vmatpush2.bf16.xpose.msra.mxu0 0
    %676 = vmatprep.subr.bf16.mxu0 0
    %677 = vmatpush2.bf16.xpose.msra.mxu0 0
    %678 = vmatprep.subr.bf16.mxu0 0
    %679 = vmatpush2.bf16.xpose.msra.mxu0 0
    %680 = vmatprep.subr.bf16.mxu0 0
    %681 = vmatpush2.bf16.xpose.msra.mxu0 0
    %682 = vmatprep.subr.bf16.mxu0 0
    %683 = vmatpush2.bf16.xpose.msra.mxu0 0
    %684 = vmatprep.mubr.bf16.mxu0 %v649
    %685 = vmatmul.mubr.bf16.gmra.mxu0 %v648
    %v686 = vpop.f32.mrf.mxu0
    %v687 = vadd.f32 %v102, %v686
    %v688 = vpop.f32.mrf.mxu0
    %v689 = vpop.f32.mrf.mxu0
    %v690 = vpop.f32.mrf.mxu0
    %691 = vdwg.mxu0
    %v692 = vxor.u32 %v687, 2147483648
    %v693 = vmul.f32 %v692, 1.442695
    %v694 = vpow.pop %v693
    %v695 = vadd.f32 %v694, 1.0
    %v696 = vrcp.pop %v695
    %v697 = vmul.f32 1.0, %v696
    %vm698 = vcmp.lt.f32.partialorder %v651, %v697
    %v699 = vsel %vm698, 1.0, 0.0
    %v700 = vpack.c.bf16 %v699, %v699
    %s701 = scalar_lea.vmem [#allocation8], 64
    %v702 = vld [vmem:[%s701] sm:$0xff]
    %v703 = vld [vmem:[%s701 + $0x8] sm:$0xff]
    %704 = vmatprep.subr.bf16.mxu0 %v184
    %705 = vmatpush1.bf16.msra.mxu0 %v183
    %706 = vmatprep.subr.bf16.mxu0 %v182
    %707 = vmatpush1.bf16.msra.mxu0 %v181
    %708 = vmatprep.subr.bf16.mxu0 %v180
    %709 = vmatpush1.bf16.msra.mxu0 %v179
    %710 = vmatprep.subr.bf16.mxu0 %v178
    %711 = vmatpush1.bf16.msra.mxu0 %v177
    %712 = vmatprep.subr.bf16.mxu0 %v176
    %713 = vmatpush1.bf16.msra.mxu0 %v175
    %714 = vmatprep.subr.bf16.mxu0 %v174
    %715 = vmatpush1.bf16.msra.mxu0 %v173
    %716 = vmatprep.subr.bf16.mxu0 %v172
    %717 = vmatpush1.bf16.msra.mxu0 %v171
    %718 = vmatprep.subr.bf16.mxu0 %v170
    %719 = vmatpush1.bf16.msra.mxu0 %v169
    %720 = vmatprep.subr.bf16.mxu0 0
    %721 = vmatpush2.bf16.msra.mxu0 0
    %722 = vmatprep.subr.bf16.mxu0 0
    %723 = vmatpush2.bf16.msra.mxu0 0
    %724 = vmatprep.subr.bf16.mxu0 0
    %725 = vmatpush2.bf16.msra.mxu0 0
    %726 = vmatprep.subr.bf16.mxu0 0
    %727 = vmatpush2.bf16.msra.mxu0 0
    %728 = vmatprep.subr.bf16.mxu0 0
    %729 = vmatpush2.bf16.msra.mxu0 0
    %730 = vmatprep.subr.bf16.mxu0 0
    %731 = vmatpush2.bf16.msra.mxu0 0
    %732 = vmatprep.subr.bf16.mxu0 0
    %733 = vmatpush2.bf16.msra.mxu0 0
    %734 = vmatprep.subr.bf16.mxu0 0
    %735 = vmatpush2.bf16.msra.mxu0 0
    %736 = vmatprep.mubr.bf16.mxu0 0
    %737 = vmatmul.mubr.bf16.gmra.mxu0 %v700
    %v738 = vpop.f32.mrf.mxu0
    %v739 = vadd.f32 %v109, %v738
    %v740 = vpop.f32.mrf.mxu0
    %v741 = vadd.f32 %v113, %v740
    %v742 = vpop.f32.mrf.mxu0
    %v743 = vpop.f32.mrf.mxu0
    %744 = vdwg.mxu0
    %v745 = vxor.u32 %v739, 2147483648
    %v746 = vxor.u32 %v741, 2147483648
    %v747 = vmul.f32 %v745, 1.442695
    %v748 = vpow.pop %v747
    %v749 = vmul.f32 %v746, 1.442695
    %v750 = vpow.pop %v749
    %v751 = vadd.f32 %v748, 1.0
    %v752 = vadd.f32 %v750, 1.0
    %v753 = vrcp.pop %v751
    %v754 = vmul.f32 1.0, %v753
    %v755 = vrcp.pop %v752
    %v756 = vmul.f32 1.0, %v755
    %vm757 = vcmp.lt.f32.partialorder %v702, %v754
    %vm758 = vcmp.lt.f32.partialorder %v703, %v756
    %v759 = vsel %vm757, 1.0, 0.0
    %v760 = vsel %vm758, 1.0, 0.0
    %v761 = vpack.c.bf16 %v759, %v759
    %v762 = vpack.c.bf16 %v760, %v760
    %s763 = scalar_lea.vmem [#allocation7], 40
    %v764 = vld [vmem:[%s763] sm:$0xff]
    %765 = vmatprep.subr.bf16.mxu0 %v184
    %766 = vmatpush1.bf16.xpose.msra.mxu0 %v183
    %767 = vmatprep.subr.bf16.mxu0 %v182
    %768 = vmatpush1.bf16.xpose.msra.mxu0 %v181
    %769 = vmatprep.subr.bf16.mxu0 %v180
    %770 = vmatpush1.bf16.xpose.msra.mxu0 %v179
    %771 = vmatprep.subr.bf16.mxu0 %v178
    %772 = vmatpush1.bf16.xpose.msra.mxu0 %v177
    %773 = vmatprep.subr.bf16.mxu0 %v176
    %774 = vmatpush1.bf16.xpose.msra.mxu0 %v175
    %775 = vmatprep.subr.bf16.mxu0 %v174
    %776 = vmatpush1.bf16.xpose.msra.mxu0 %v173
    %777 = vmatprep.subr.bf16.mxu0 %v172
    %778 = vmatpush1.bf16.xpose.msra.mxu0 %v171
    %779 = vmatprep.subr.bf16.mxu0 %v170
    %780 = vmatpush1.bf16.xpose.msra.mxu0 %v169
    %781 = vmatprep.subr.bf16.mxu0 0
    %782 = vmatpush2.bf16.xpose.msra.mxu0 0
    %783 = vmatprep.subr.bf16.mxu0 0
    %784 = vmatpush2.bf16.xpose.msra.mxu0 0
    %785 = vmatprep.subr.bf16.mxu0 0
    %786 = vmatpush2.bf16.xpose.msra.mxu0 0
    %787 = vmatprep.subr.bf16.mxu0 0
    %788 = vmatpush2.bf16.xpose.msra.mxu0 0
    %789 = vmatprep.subr.bf16.mxu0 0
    %790 = vmatpush2.bf16.xpose.msra.mxu0 0
    %791 = vmatprep.subr.bf16.mxu0 0
    %792 = vmatpush2.bf16.xpose.msra.mxu0 0
    %793 = vmatprep.subr.bf16.mxu0 0
    %794 = vmatpush2.bf16.xpose.msra.mxu0 0
    %795 = vmatprep.subr.bf16.mxu0 0
    %796 = vmatpush2.bf16.xpose.msra.mxu0 0
    %797 = vmatprep.mubr.bf16.mxu0 %v762
    %798 = vmatmul.mubr.bf16.gmra.mxu0 %v761
    %v799 = vpop.f32.mrf.mxu0
    %v800 = vadd.f32 %v102, %v799
    %v801 = vpop.f32.mrf.mxu0
    %v802 = vpop.f32.mrf.mxu0
    %v803 = vpop.f32.mrf.mxu0
    %804 = vdwg.mxu0
    %v805 = vxor.u32 %v800, 2147483648
    %v806 = vmul.f32 %v805, 1.442695
    %v807 = vpow.pop %v806
    %v808 = vadd.f32 %v807, 1.0
    %v809 = vrcp.pop %v808
    %v810 = vmul.f32 1.0, %v809
    %vm811 = vcmp.lt.f32.partialorder %v764, %v810
    %v812 = vsel %vm811, 1.0, 0.0
    %v813 = vpack.c.bf16 %v812, %v812
    %v814 = vunpack.c.l.bf16 %v761
    %v815 = vunpack.c.l.bf16 %v762
    %816 = vst [vmem:[#allocation10] sm:$0xff] %v814
    %817 = vst [vmem:[#allocation10 + $0x8] sm:$0xff] %v815
    %v818 = vunpack.c.l.bf16 %v813
    %819 = vst [vmem:[#allocation11] sm:$0xff] %v818
    // Predicated region
    $region42: #{tpu_custom_call.1} parent=1 // pred_check
      _
    $region43: #{tpu_custom_call.1} parent=1 // pred_check_branch
      %821 = sbr.rel (0) target = $region45
    $region44: #{tpu_custom_call.1} parent=1 // pred_region
      %s823 = ssub.s32 256, 256
      %824 = vsyncadd [#allocation4], %s823
      %s826 = sshll.u32 [#allocation10], 4
      %s827 = int_to_ptr.vmem [resolvable:$true] %s826
      %829 = dma.vmem_to_hbm [thread:$0]  %s827, 256, %s6, [#allocation4]
    $region45: #{tpu_custom_call.1} parent=1 // pred_fallthru
      _
    // Predicated region
    $region46: #{tpu_custom_call.1} parent=1 // pred_check
      _
    $region47: #{tpu_custom_call.1} parent=1 // pred_check_branch
      %831 = sbr.rel (0) target = $region49
    $region48: #{tpu_custom_call.1} parent=1 // pred_region
      %s833 = ssub.s32 128, 128
      %834 = vsyncadd [#allocation12], %s833
      %s836 = sshll.u32 [#allocation11], 4
      %s837 = int_to_ptr.vmem [resolvable:$true] %s836
      %839 = dma.vmem_to_hbm [thread:$0]  %s837, 128, %s7, [#allocation12]
    $region49: #{tpu_custom_call.1} parent=1 // pred_fallthru
      _
    // Predicated region
    $region50: #{tpu_custom_call.1} parent=1 // pred_check
      _
    $region51: #{tpu_custom_call.1} parent=1 // pred_check_branch
      %841 = sbr.rel (0) target = $region53
    $region52: #{tpu_custom_call.1} parent=1 // pred_region
      %842 = dma.done [#allocation4], 256
    $region53: #{tpu_custom_call.1} parent=1 // pred_fallthru
      _
    // Predicated region
    $region54: #{tpu_custom_call.1} parent=1 // pred_check
      _
    $region55: #{tpu_custom_call.1} parent=1 // pred_check_branch
      %844 = sbr.rel (0) target = $region57
    $region56: #{tpu_custom_call.1} parent=1 // pred_region
      %845 = dma.done [#allocation12], 128
    $region57: #{tpu_custom_call.1} parent=1 // pred_fallthru
      _
    %846 = vsyncpa [#allocation3], 1
    %847 = vsyncpa [#allocation6], 1
    %848 = vsyncpa [#allocation9], 1
    %849 = vsyncpa [#allocation4], 1
    %850 = vsyncpa [#allocation12], 1

</llo_original>
